<compile_context>
chip_gen: v6e
topology: v6e:2x2x1
jax: 0.10.0
libtpu: 0.0.40
codegen_flags: <defaults>
</compile_context>

<pallas_src>
import functools

import jax
import jax.numpy as jnp
from jax import lax
from jax.experimental import pallas as pl
from jax.experimental.pallas import tpu as pltpu


def _round_up(x, m):
    return (x + m - 1) // m * m


# -----------------------------------------------------------------------------
# Pass 1: per-(phase, M-tile) ConvTranspose matmul + BatchNorm partial statistics.
# -----------------------------------------------------------------------------
def _conv_phase_kernel(patch_ref, w_ref, y_ref, stat_ref):
    # patch_ref: (1, TM, 4*Cin)  w_ref: (1, 4*Cin, Cout)  -> single MXU matmul.
    y = jnp.dot(patch_ref[0], w_ref[0], preferred_element_type=jnp.float32)
    y_ref[0] = y
    s = jnp.sum(y, axis=0, keepdims=True)           # (1, Cout)
    ss = jnp.sum(y * y, axis=0, keepdims=True)      # (1, Cout)
    stat_ref[0, 0] = jnp.concatenate([s, ss], axis=0)   # (2, Cout) per-tile partials


# -----------------------------------------------------------------------------
# Pass 2: BatchNorm apply (precomputed scale/shift) + Dropout(p) + ReLU.
# -----------------------------------------------------------------------------
def _bn_dropout_relu_kernel(seed_ref, y_ref, scale_ref, shift_ref, out_ref, *,
                            n_cols, tile_rows, tiles_per_phase,
                            dropout_p, apply_dropout):
    z = y_ref[0] * scale_ref[...] + shift_ref[...]          # (TM, Cout) f32
    if apply_dropout:
        # TODO(synk): torch.nn.Dropout's RNG stream cannot be reproduced; we use a
        # counter-based hash PRNG (per-tile, seed + global element index) with the
        # same Bernoulli(1-p) keep / 1/(1-p) scale semantics.
        tile_id = pl.program_id(0) * tiles_per_phase + pl.program_id(1)
        row = lax.broadcasted_iota(jnp.int32, z.shape, 0)
        col = lax.broadcasted_iota(jnp.int32, z.shape, 1)
        idx = tile_id * (tile_rows * n_cols) + row * n_cols + col
        h = idx.astype(jnp.uint32) + seed_ref[0].astype(jnp.uint32) * jnp.uint32(0x9E3779B9)
        h = h ^ (h >> 16)
        h = h * jnp.uint32(0x7FEB352D)
        h = h ^ (h >> 15)
        h = h * jnp.uint32(0x846CA68B)
        h = h ^ (h >> 16)
        # keep iff uniform(0,1) < 1-p, decided on the top 23 bits vs an integer threshold.
        keep_threshold = jnp.int32(int(round((1.0 - dropout_p) * float(1 << 23))))
        keep = (h >> 9).astype(jnp.int32) < keep_threshold
        z = jnp.where(keep, z * jnp.float32(1.0 / (1.0 - dropout_p)), jnp.float32(0.0))
    out_ref[0] = jnp.maximum(z, jnp.float32(0.0))


def upblock_forward(x_nchw, w_t, gamma, beta, *, seed=0, dropout=True, eps=1e-5,
                    matmul_dtype=jnp.bfloat16, tile_m=512):
    """UpBlock forward. x_nchw: (N, Cin, H, W); w_t: ConvTranspose2d weight (Cin, Cout, 4, 4)."""
    N, Cin, H, W = x_nchw.shape
    cin_w, Cout, KH, KW = w_t.shape
    assert cin_w == Cin and KH == 4 and KW == 4
    OH, OW = 2 * H, 2 * W
    Mq = N * H * W                    # output rows per parity phase
    K = 4 * Cin                       # 2x2 taps folded into the contraction dim

    # ---- host glue: NHWC + 1px zero halo, 4-phase (sub-pixel) im2col ------------
    # TODO(synk): for very large activations, gather the 2x2 taps in-kernel from a
    # halo'd VMEM tile (pl.ds) instead of materializing the (4, M, 4*Cin) patches.
    x_nhwc = jnp.transpose(x_nchw, (0, 2, 3, 1)).astype(matmul_dtype)
    x_pad = jnp.pad(x_nhwc, ((0, 0), (1, 1), (1, 1), (0, 0)))

    # For output (oh, ow) = (2*oy + pr, 2*ox + pc) with stride=2, pad=1:
    #   parity 0 -> kernel taps {1, 3} hitting halo offsets {1, 0}
    #   parity 1 -> kernel taps {0, 2} hitting halo offsets {2, 1}
    tap = {0: ((1, 1), (0, 3)), 1: ((2, 0), (1, 2))}     # (halo offset, kernel index)
    phases = ((0, 0), (0, 1), (1, 0), (1, 1))            # (oh % 2, ow % 2)

    patch_list, weight_list = [], []
    for pr, pc in phases:
        cols, wts = [], []
        for ro, kh in tap[pr]:
            for co, kw in tap[pc]:
                cols.append(x_pad[:, ro:ro + H, co:co + W, :].reshape(Mq, Cin))
                wts.append(w_t[:, :, kh, kw])                       # (Cin, Cout)
        patch_list.append(jnp.concatenate(cols, axis=-1))           # (Mq, 4*Cin)
        weight_list.append(jnp.concatenate(wts, axis=0))            # (4*Cin, Cout)
    patches = jnp.stack(patch_list, axis=0)                         # (4, Mq, K)
    weights = jnp.stack(weight_list, axis=0).astype(matmul_dtype)   # (4, K, Cout)

    TM = min(tile_m, _round_up(Mq, 8))
    Mp = _round_up(Mq, TM)
    if Mp != Mq:   # zero pad rows: contribute nothing to the matmul nor the BN sums
        patches = jnp.pad(patches, ((0, 0), (0, Mp - Mq), (0, 0)))
    n_tiles = Mp // TM

    # ---- pass 1: conv-transpose matmuls + per-tile BN partials ------------------
    y, stats = pl.pallas_call(
        _conv_phase_kernel,
        out_shape=(jax.ShapeDtypeStruct((4, Mp, Cout), jnp.float32),
                   jax.ShapeDtypeStruct((4, n_tiles, 2, Cout), jnp.float32)),
        grid_spec=pltpu.PrefetchScalarGridSpec(
            num_scalar_prefetch=0,
            grid=(4, n_tiles),
            in_specs=[pl.BlockSpec((1, TM, K), lambda p, i: (p, i, 0)),
                      pl.BlockSpec((1, K, Cout), lambda p, i: (p, 0, 0))],
            out_specs=(pl.BlockSpec((1, TM, Cout), lambda p, i: (p, i, 0)),
                       pl.BlockSpec((1, 1, 2, Cout), lambda p, i: (p, i, 0, 0))),
        ),
        compiler_params=pltpu.CompilerParams(
            dimension_semantics=("parallel", "parallel")),
    )(patches, weights)

    # ---- tiny host reduction of BN statistics (training-mode batch stats) -------
    m_total = jnp.float32(N * OH * OW)
    ch_sum = jnp.sum(stats[:, :, 0, :], axis=(0, 1))
    ch_ssq = jnp.sum(stats[:, :, 1, :], axis=(0, 1))
    mean = ch_sum / m_total
    var = jnp.maximum(ch_ssq / m_total - mean * mean, 0.0)   # biased variance
    scale = gamma.astype(jnp.float32) * lax.rsqrt(var + eps)
    shift = beta.astype(jnp.float32) - mean * scale
    scale2 = scale.reshape(1, Cout)
    shift2 = shift.reshape(1, Cout)

    # ---- pass 2: BN apply + Dropout(0.5) + ReLU ---------------------------------
    seed_arr = jnp.asarray([seed], dtype=jnp.int32)
    epilogue = functools.partial(
        _bn_dropout_relu_kernel, n_cols=Cout, tile_rows=TM, tiles_per_phase=n_tiles,
        dropout_p=0.5, apply_dropout=bool(dropout))
    out_flat = pl.pallas_call(
        epilogue,
        out_shape=jax.ShapeDtypeStruct((4, Mp, Cout), jnp.float32),
        grid_spec=pltpu.PrefetchScalarGridSpec(
            num_scalar_prefetch=1,              # seed -> SMEM
            grid=(4, n_tiles),
            in_specs=[pl.BlockSpec((1, TM, Cout), lambda p, i, seed: (p, i, 0)),
                      pl.BlockSpec((1, Cout), lambda p, i, seed: (0, 0)),
                      pl.BlockSpec((1, Cout), lambda p, i, seed: (0, 0))],
            out_specs=pl.BlockSpec((1, TM, Cout), lambda p, i, seed: (p, i, 0)),
        ),
        compiler_params=pltpu.CompilerParams(
            dimension_semantics=("parallel", "parallel")),
    )(seed_arr, y, scale2, shift2)

    # ---- reassemble phases: (pr, pc, N, H, W, C) -> NCHW -------------------------
    # TODO(synk): Cout < 128 makes per-row stores lane-sparse (worst on v5e); real
    # UpBlock channel counts (64..512) are fine, otherwise pad Cout to a lane multiple.
    out_ph = out_flat[:, :Mq, :].reshape(2, 2, N, H, W, Cout)
    out_nhwc = jnp.transpose(out_ph, (2, 3, 0, 4, 1, 5)).reshape(N, OH, OW, Cout)
    return jnp.transpose(out_nhwc, (0, 3, 1, 2))


def _reference_no_dropout(x_nchw, w_t, gamma, beta, eps=1e-5):
    """Pure-JAX reference (dropout disabled) for correctness checking."""
    w_flip = jnp.transpose(w_t[:, :, ::-1, ::-1], (1, 0, 2, 3))   # (Cout, Cin, 4, 4)
    y = lax.conv_general_dilated(
        x_nchw.astype(jnp.float32), w_flip.astype(jnp.float32),
        window_strides=(1, 1), padding=[(2, 2), (2, 2)], lhs_dilation=(2, 2),
        dimension_numbers=("NCHW", "OIHW", "NCHW"))
    mean = jnp.mean(y, axis=(0, 2, 3), keepdims=True)
    var = jnp.mean((y - mean) ** 2, axis=(0, 2, 3), keepdims=True)
    z = (y - mean) * lax.rsqrt(var + eps)
    z = z * gamma.reshape(1, -1, 1, 1) + beta.reshape(1, -1, 1, 1)
    return jnp.maximum(z, 0.0)


if __name__ == "__main__":
    key = jax.random.PRNGKey(0)
    k_x, k_w = jax.random.split(key)

    N, Cin, Cout, H, W = 2, 4, 8, 16, 16
    x = jax.random.normal(k_x, (N, Cin, H, W), jnp.float32)
    # ConvTranspose2d has bias=False; BN affine params default to gamma=1, beta=0.
    w_t = jax.random.normal(k_w, (Cin, Cout, 4, 4), jnp.float32) * 0.1
    gamma = jnp.ones((Cout,), jnp.float32)
    beta = jnp.zeros((Cout,), jnp.float32)

    # 1) exact check (f32 MXU inputs) against the pure-JAX reference, dropout off.
    out_f32 = upblock_forward(x, w_t, gamma, beta, dropout=False,
                              matmul_dtype=jnp.float32)
    jax.block_until_ready(out_f32)
    ref = _reference_no_dropout(x, w_t, gamma, beta)
    assert out_f32.shape == (N, Cout, 2 * H, 2 * W)
    assert jnp.allclose(out_f32, ref, rtol=1e-4, atol=1e-4), "f32 mismatch vs reference"

    # 2) default bf16-MXU path vs the same reference fed bf16-rounded inputs.
    out_bf16 = upblock_forward(x, w_t, gamma, beta, dropout=False)
    jax.block_until_ready(out_bf16)
    x_q = x.astype(jnp.bfloat16).astype(jnp.float32)
    w_q = w_t.astype(jnp.bfloat16).astype(jnp.float32)
    ref_q = _reference_no_dropout(x_q, w_q, gamma, beta)
    assert jnp.allclose(out_bf16, ref_q, rtol=1e-3, atol=1e-3), "bf16 mismatch vs reference"

    # 3) full module semantics: training-mode BN + Dropout(0.5) + ReLU.
    out = upblock_forward(x, w_t, gamma, beta, seed=42, dropout=True)
    jax.block_until_ready(out)
    assert out.shape == (N, Cout, 2 * H, 2 * W)
    assert bool(jnp.all(out >= 0.0))
    zero_frac = float(jnp.mean(out == 0.0))
    assert 0.55 < zero_frac < 0.95, f"unexpected dropout zero fraction {zero_frac}"

    print("KERNEL_OK")
</pallas_src>

<mosaic_0001>
module attributes {stable_mosaic.version = 11 : i64} {
  func.func @_conv_phase_kernel(%arg0: i32, %arg1: i32, %arg2: memref<1x512x16xf32, #tpu.memory_space<vmem>>, %arg3: memref<1x16x8xf32, #tpu.memory_space<vmem>>, %arg4: memref<1x512x8xf32, #tpu.memory_space<vmem>>, %arg5: memref<1x1x2x8xf32, #tpu.memory_space<vmem>>) attributes {dimension_semantics = [#tpu.dimension_semantics<parallel>, #tpu.dimension_semantics<parallel>], iteration_bounds = array<i64: 4, 1>, scalar_prefetch = 0 : i64, scratch_operands = 0 : i64, tpu.core_type = #tpu.core_type<tc>, window_params = [{transform_indices = @transform_0, window_bounds = array<i64: 1, 512, 16>}, {transform_indices = @transform_1, window_bounds = array<i64: 1, 16, 8>}, {transform_indices = @transform_2, window_bounds = array<i64: 1, 512, 8>}, {transform_indices = @transform_3, window_bounds = array<i64: 1, 1, 2, 8>}]} {
    %c0 = arith.constant 0 : index
    %c0_0 = arith.constant 0 : index
    %c0_1 = arith.constant 0 : index
    %0 = vector.load %arg2[%c0, %c0_0, %c0_1] : memref<1x512x16xf32, #tpu.memory_space<vmem>>, vector<1x512x16xf32>
    %1 = vector.shape_cast %0 : vector<1x512x16xf32> to vector<512x16xf32>
    %c0_2 = arith.constant 0 : index
    %c0_3 = arith.constant 0 : index
    %c0_4 = arith.constant 0 : index
    %2 = vector.load %arg3[%c0_2, %c0_3, %c0_4] : memref<1x16x8xf32, #tpu.memory_space<vmem>>, vector<1x16x8xf32>
    %3 = vector.shape_cast %2 : vector<1x16x8xf32> to vector<16x8xf32>
    %cst = arith.constant dense<0.000000e+00> : vector<512x8xf32>
    %4 = tpu.matmul %1, %3, %cst {dimension_numbers = #tpu.dot_dimension_numbers<[1], [0], [0], [1], [0, 0, 1, 1], [], []>} : vector<512x16xf32>, vector<16x8xf32>, vector<512x8xf32> -> vector<512x8xf32>
    %c0_5 = arith.constant 0 : index
    %c0_6 = arith.constant 0 : index
    %c0_7 = arith.constant 0 : index
    %5 = vector.load %arg4[%c0_5, %c0_6, %c0_7] : memref<1x512x8xf32, #tpu.memory_space<vmem>>, vector<1x512x8xf32>
    %6 = vector.shape_cast %5 : vector<1x512x8xf32> to vector<512x8xf32>
    %7 = vector.shape_cast %4 : vector<512x8xf32> to vector<1x512x8xf32>
    tpu.vector_store %arg4[%c0_5, %c0_6, %c0_7], %7 {strides = array<i32>} : memref<1x512x8xf32, #tpu.memory_space<vmem>>, vector<1x512x8xf32>,
    %cst_8 = arith.constant dense<0.000000e+00> : vector<8xf32>
    %8 = vector.multi_reduction <add>, %4, %cst_8 [0] : vector<512x8xf32> to vector<8xf32>
    %9 = vector.shape_cast %8 : vector<8xf32> to vector<1x8xf32>
    %10 = arith.mulf %4, %4 : vector<512x8xf32>
    %cst_9 = arith.constant dense<0.000000e+00> : vector<8xf32>
    %11 = vector.multi_reduction <add>, %10, %cst_9 [0] : vector<512x8xf32> to vector<8xf32>
    %12 = vector.shape_cast %11 : vector<8xf32> to vector<1x8xf32>
    %13 = tpu.concatenate %9, %12 in 0 : vector<1x8xf32>, vector<1x8xf32> -> vector<2x8xf32>
    %c0_10 = arith.constant 0 : index
    %c0_11 = arith.constant 0 : index
    %c0_12 = arith.constant 0 : index
    %c0_13 = arith.constant 0 : index
    %14 = vector.load %arg5[%c0_10, %c0_11, %c0_12, %c0_13] : memref<1x1x2x8xf32, #tpu.memory_space<vmem>>, vector<1x1x2x8xf32>
    %15 = vector.shape_cast %14 : vector<1x1x2x8xf32> to vector<2x8xf32>
    %16 = vector.shape_cast %13 : vector<2x8xf32> to vector<1x1x2x8xf32>
    tpu.vector_store %arg5[%c0_10, %c0_11, %c0_12, %c0_13], %16 {strides = array<i32>} : memref<1x1x2x8xf32, #tpu.memory_space<vmem>>, vector<1x1x2x8xf32>,
    return
  }
  func.func @transform_0(%arg0: i32, %arg1: i32) -> (i32, i32, i32) {
    %c0_i32 = arith.constant 0 : i32
    %c0_i32_0 = arith.constant 0 : i32
    return %arg0, %arg1, %c0_i32 : i32, i32, i32
  }
  func.func @transform_1(%arg0: i32, %arg1: i32) -> (i32, i32, i32) {
    %c0_i32 = arith.constant 0 : i32
    %c0_i32_0 = arith.constant 0 : i32
    %c0_i32_1 = arith.constant 0 : i32
    return %arg0, %c0_i32, %c0_i32_0 : i32, i32, i32
  }
  func.func @transform_2(%arg0: i32, %arg1: i32) -> (i32, i32, i32) {
    %c0_i32 = arith.constant 0 : i32
    %c0_i32_0 = arith.constant 0 : i32
    return %arg0, %arg1, %c0_i32 : i32, i32, i32
  }
  func.func @transform_3(%arg0: i32, %arg1: i32) -> (i32, i32, i32, i32) {
    %c0_i32 = arith.constant 0 : i32
    %c0_i32_0 = arith.constant 0 : i32
    %c0_i32_1 = arith.constant 0 : i32
    return %arg0, %arg1, %c0_i32, %c0_i32_0 : i32, i32, i32, i32
  }
}

</mosaic_0001>

<llo_original>
// kernel: tpu_custom_call.1
$region0: #{tpu_custom_call.1}
  #allocation0 [shape = 'u32[]', space=smem, size = 0x4, offset = 0x4, fixed_abs, tag = 'smem constant byte address 0x4 - core index']
  #allocation1 [shape = 'u32[144,128]{1,0:T(1,128)}', space=vmem, size = 0x12000, scoped, tag = 'internal scratch']
  %s0 = inlined_call_operand.vmem [shape: f32[4,512,16], index: 0, kind: input, shape index: {}]
  %s1 = inlined_call_operand.vmem [shape: f32[4,16,8], index: 1, kind: input, shape index: {}]
  %s2 = inlined_call_operand.vmem [shape: f32[4,512,8], index: 2, kind: output, shape index: {0}]
  %s3 = inlined_call_operand.hbm [shape: f32[4,1,2,8], index: 3, kind: output, shape index: {1}]
  %4 = xla_tuple %s2, %s3
  %s5 = sld [smem:[#allocation0]]
  $region49: #{tpu_custom_call.1} parent=0
    _
  %s7 = ssub.s32 1, %s5
  %s8 = scalar_select 0, %s7, %s5
  $region1: #{tpu_custom_call.1} parent=0
    #allocation2 [shape = 'u8[2048]{0}', space=vmem, size = 0x800, scoped, tag = 'output window, operand 1']
    #allocation3 [shape = 's32[2]{0}', space=sflag, size = 0x8, scoped, tag = 'scoped memory for tpu_custom_call.1']
    %9 = vsyncpa [#allocation3], 0
    %s10 = scalar_lea.sflag [#allocation3], 1
    %11 = vsyncpa %s10, 0
    loop: start=0, step=1, limit=6
    $region2: #{tpu_custom_call.1} parent=1 // loop_pre_header
      _
    $region3: #{tpu_custom_call.1} parent=1 // loop_header
      %s13 = sphi 0, %s17
      %p14 = scmp.ge.s32.totalorder %s13, 6
      %s20 = sphi 0, %s32
      %s21 = sphi 0, %s28
      %s22 = sphi 0, %s20
      %s23 = sphi 0, %s21
      %s24 = sphi 0, %s22
      %s25 = sphi 0, %s23
      %s37 = sphi 0, %s39
      %s40 = sphi 0, %s37
      %s41 = sphi 0, %s40
      %s57 = sphi 0, %s41
      %s63 = sphi 0, %s65
      %s66 = sphi 0, %s63
      %s67 = sphi 0, %s66
      %s83 = sphi 0, %s67
      %s91 = sphi 0, %s93
      %s94 = sphi 0, %s91
      %s95 = sphi 0, %s94
      %s111 = sphi 0, %s95
      %s119 = sphi 0, %s121
      %s122 = sphi 0, %s119
      %s123 = sphi 0, %s122
      %s139 = sphi 0, %s123
    $region4: #{tpu_custom_call.1} parent=1 // loop_header_branch
      %16 = sbr.rel (%p14) target = $region8
    $region5: #{tpu_custom_call.1} parent=1 // loop_body
      %s18 = ssub.s32 %s13, 1
      %s19 = ssub.s32 %s13, 2
      %s26 = sadd.s32 1, %s21
      %p27 = scmp.ge.s32.totalorder %s26, 1
      %s28 = scalar_select %p27, 0, %s26
      %s29 = sadd.s32 1, %s20
      %s30 = scalar_select %p27, %s29, %s20
      %p31 = scmp.ge.s32.totalorder %s30, 4
      %s32 = scalar_select %p31, 0, %s30
      %s33 = ssub.s32 %s20, %s32
      %s34 = ssub.s32 %s21, %s28
      %s35 = sor.u32 %s33, %s34
      %p36 = scmp.eq.s32.totalorder %s35, 0
      %s38 = sadd.s32 %s37, 1
      %s39 = scalar_select %p36, %s37, %s38
      %p42 = pneg %p36
      %p43 = scmp.eq.s32.totalorder %s13, 3
      %p44 = por %p42, %p43
      %p45 = scmp.ne.s32.totalorder %s37, %s40
      %p46 = scmp.eq.s32.totalorder %s13, 0
      %p47 = por %p45, %p46
      %p48 = scmp.ne.s32.totalorder %s37, %s40
      %p49 = scmp.eq.s32.totalorder %s18, 3
      %p50 = por %p48, %p49
      %p51 = scmp.ne.s32.totalorder %s40, %s41
      %p52 = scmp.eq.s32.totalorder %s18, 0
      %p53 = por %p51, %p52
      %p54 = scmp.ne.s32.totalorder %s40, %s41
      %p55 = scmp.eq.s32.totalorder %s19, 3
      %p56 = por %p54, %p55
      %p58 = scmp.ne.s32.totalorder %s41, %s57
      %p59 = scmp.eq.s32.totalorder %s19, 0
      %p60 = por %p58, %p59
      %s61 = ssub.s32 %s20, %s32
      %p62 = scmp.eq.s32.totalorder %s61, 0
      %s64 = sadd.s32 %s63, 1
      %s65 = scalar_select %p62, %s63, %s64
      %p68 = pneg %p62
      %p69 = scmp.eq.s32.totalorder %s13, 3
      %p70 = por %p68, %p69
      %p71 = scmp.ne.s32.totalorder %s63, %s66
      %p72 = scmp.eq.s32.totalorder %s13, 0
      %p73 = por %p71, %p72
      %p74 = scmp.ne.s32.totalorder %s63, %s66
      %p75 = scmp.eq.s32.totalorder %s18, 3
      %p76 = por %p74, %p75
      %p77 = scmp.ne.s32.totalorder %s66, %s67
      %p78 = scmp.eq.s32.totalorder %s18, 0
      %p79 = por %p77, %p78
      %p80 = scmp.ne.s32.totalorder %s66, %s67
      %p81 = scmp.eq.s32.totalorder %s19, 3
      %p82 = por %p80, %p81
      %p84 = scmp.ne.s32.totalorder %s67, %s83
      %p85 = scmp.eq.s32.totalorder %s19, 0
      %p86 = por %p84, %p85
      %s87 = ssub.s32 %s20, %s32
      %s88 = ssub.s32 %s21, %s28
      %s89 = sor.u32 %s87, %s88
      %p90 = scmp.eq.s32.totalorder %s89, 0
      %s92 = sadd.s32 %s91, 1
      %s93 = scalar_select %p90, %s91, %s92
      %p96 = pneg %p90
      %p97 = scmp.eq.s32.totalorder %s13, 3
      %p98 = por %p96, %p97
      %p99 = scmp.ne.s32.totalorder %s91, %s94
      %p100 = scmp.eq.s32.totalorder %s13, 0
      %p101 = por %p99, %p100
      %p102 = scmp.ne.s32.totalorder %s91, %s94
      %p103 = scmp.eq.s32.totalorder %s18, 3
      %p104 = por %p102, %p103
      %p105 = scmp.ne.s32.totalorder %s94, %s95
      %p106 = scmp.eq.s32.totalorder %s18, 0
      %p107 = por %p105, %p106
      %p108 = scmp.ne.s32.totalorder %s94, %s95
      %p109 = scmp.eq.s32.totalorder %s19, 3
      %p110 = por %p108, %p109
      %p112 = scmp.ne.s32.totalorder %s95, %s111
      %p113 = scmp.eq.s32.totalorder %s19, 0
      %p114 = por %p112, %p113
      %s115 = ssub.s32 %s20, %s32
      %s116 = ssub.s32 %s21, %s28
      %s117 = sor.u32 %s115, %s116
      %p118 = scmp.eq.s32.totalorder %s117, 0
      %s120 = sadd.s32 %s119, 1
      %s121 = scalar_select %p118, %s119, %s120
      %p124 = pneg %p118
      %p125 = scmp.eq.s32.totalorder %s13, 3
      %p126 = por %p124, %p125
      %p127 = scmp.ne.s32.totalorder %s119, %s122
      %p128 = scmp.eq.s32.totalorder %s13, 0
      %p129 = por %p127, %p128
      %p130 = scmp.ne.s32.totalorder %s119, %s122
      %p131 = scmp.eq.s32.totalorder %s18, 3
      %p132 = por %p130, %p131
      %p133 = scmp.ne.s32.totalorder %s122, %s123
      %p134 = scmp.eq.s32.totalorder %s18, 0
      %p135 = por %p133, %p134
      %p136 = scmp.ne.s32.totalorder %s122, %s123
      %p137 = scmp.eq.s32.totalorder %s19, 3
      %p138 = por %p136, %p137
      %p140 = scmp.ne.s32.totalorder %s123, %s139
      %p141 = scmp.eq.s32.totalorder %s19, 0
      %p142 = por %p140, %p141
      %p143 = scmp.le.s32.totalorder 1, %s13
      %p144 = scmp.lt.s32.totalorder %s13, 5
      %p145 = pnand %p143, %p144
      %p146 = pneg %p145
      // Predicated region
      $region9: #{tpu_custom_call.1} parent=5 // pred_check
        _
      $region10: #{tpu_custom_call.1} parent=5 // pred_check_branch
        %148 = sbr.rel (%p145) target = $region12
      $region11: #{tpu_custom_call.1} parent=5 // pred_region
        %s149 = ssub.s32 %s13, 1
      $region12: #{tpu_custom_call.1} parent=5 // pred_fallthru
        _
      %p150 = scmp.lt.s32.totalorder %s13, 4
      // Predicated region
      $region13: #{tpu_custom_call.1} parent=5 // pred_check
        %p151 = pneg %p150
      $region14: #{tpu_custom_call.1} parent=5 // pred_check_branch
        %153 = sbr.rel (%p151) target = $region16
      $region15: #{tpu_custom_call.1} parent=5 // pred_region
        // Predicated region
        $region17: #{tpu_custom_call.1} parent=15 // pred_check
          %p154 = pneg %p47
        $region18: #{tpu_custom_call.1} parent=15 // pred_check_branch
          %156 = sbr.rel (%p154) target = $region20
        $region19: #{tpu_custom_call.1} parent=15 // pred_region
          %s157 = smul.u32 64, %s21
          %p158 = scmp.lt.s32.totalorder %s20, 3
          %s159 = scalar_select %p158, %s20, 3
          %p160 = scmp.lt.s32.totalorder %s157, 63
          %s161 = scalar_select %p160, %s157, 63
          %s162 = smul.addr %s159, 64
          %s163 = sadd.s32 %s161, %s162
          %s164 = smul.addr %s163, 8
          %s165 = scalar_lea.vmem %s0, %s164
          %s166 = smul.u32 64, %s21
        $region20: #{tpu_custom_call.1} parent=15 // pred_fallthru
          _
        // Predicated region
        $region21: #{tpu_custom_call.1} parent=15 // pred_check
          %p167 = pneg %p73
        $region22: #{tpu_custom_call.1} parent=15 // pred_check_branch
          %169 = sbr.rel (%p167) target = $region24
        $region23: #{tpu_custom_call.1} parent=15 // pred_region
          %p170 = scmp.lt.s32.totalorder %s20, 3
          %s171 = scalar_select %p170, %s20, 3
          %s172 = smul.addr %s171, 2
          %s173 = smul.addr %s172, 8
          %s174 = scalar_lea.vmem %s1, %s173
        $region24: #{tpu_custom_call.1} parent=15 // pred_fallthru
          _
      $region16: #{tpu_custom_call.1} parent=5 // pred_fallthru
        _
      %p175 = scmp.le.s32.totalorder 1, %s13
      %p176 = scmp.lt.s32.totalorder %s13, 5
      %p177 = pnand %p175, %p176
      %p178 = pneg %p177
      // Predicated region
      $region25: #{tpu_custom_call.1} parent=5 // pred_check
        _
      $region26: #{tpu_custom_call.1} parent=5 // pred_check_branch
        %180 = sbr.rel (%p177) target = $region28
      $region27: #{tpu_custom_call.1} parent=5 // pred_region
        %s181 = ssub.s32 %s13, 1
        %s182 = smul.u32 64, %s23
        %p183 = scmp.lt.s32.totalorder %s22, 3
        %s184 = scalar_select %p183, %s22, 3
        %p185 = scmp.lt.s32.totalorder %s182, 63
        %s186 = scalar_select %p185, %s182, 63
        %s187 = smul.addr %s184, 64
        %s188 = sadd.s32 %s186, %s187
        %s189 = smul.addr %s188, 8
        %s190 = scalar_lea.vmem %s0, %s189
        %p191 = pneg %p53
        %p192 = pneg %p50
        %p193 = scmp.lt.s32.totalorder %s22, 3
        %s194 = scalar_select %p193, %s22, 3
        %s195 = smul.addr %s194, 2
        %s196 = smul.addr %s195, 8
        %s197 = scalar_lea.vmem %s1, %s196
        %p198 = pneg %p79
        %p199 = pneg %p76
        %p200 = pneg %p107
        %p201 = pneg %p104
        %s202 = smul.u32 64, %s23
        %p203 = scmp.lt.s32.totalorder %s22, 3
        %s204 = scalar_select %p203, %s22, 3
        %p205 = scmp.lt.s32.totalorder %s202, 63
        %s206 = scalar_select %p205, %s202, 63
        %s207 = smul.addr %s204, 64
        %s208 = sadd.s32 %s206, %s207
        %s209 = smul.addr %s208, 8
        %s210 = scalar_lea.vmem %s2, %s209
        %p211 = pneg %p135
        %p212 = pneg %p132
        %s213 = sand.u32 %s122, 1
        %s214 = scalar_lea.sflag [#allocation3], %s213
        %s215 = sand.u32 %s122, 1
        %s216 = smul.addr %s215, 2
        %s217 = scalar_lea.vmem [#allocation2], %s216
        %s218 = smul.u32 64, %s23
        %p219 = scmp.lt.s32.totalorder %s22, 3
        %s220 = scalar_select %p219, %s22, 3
        %p221 = scmp.lt.s32.totalorder %s218, 63
        %s222 = scalar_select %p221, %s218, 63
        %s223 = smul.addr %s220, 64
        %s224 = sadd.s32 %s222, %s223
        %s225 = smul.addr %s224, 8
        %s226 = scalar_lea.vmem %s0, %s225
        %s227 = smul.u32 64, %s23
        %p228 = scmp.lt.s32.totalorder %s22, 3
        %s229 = scalar_select %p228, %s22, 3
        %s230 = smul.addr %s229, 2
        %s231 = smul.addr %s230, 8
        %s232 = scalar_lea.vmem %s1, %s231
        %s233 = smul.u32 64, %s23
        %p234 = scmp.lt.s32.totalorder %s22, 3
        %s235 = scalar_select %p234, %s22, 3
        %p236 = scmp.lt.s32.totalorder %s233, 63
        %s237 = scalar_select %p236, %s233, 63
        %s238 = smul.addr %s235, 64
        %s239 = sadd.s32 %s237, %s238
        %s240 = smul.addr %s239, 8
        %s241 = scalar_lea.vmem %s2, %s240
        %s242 = smul.u32 64, %s23
        %v243 = vld [vmem:[%s226] sm:$0xff]
        %v244 = vld [vmem:[%s226 + $0x8] sm:$0xff]
        %v245 = vld [vmem:[%s226 + $0x10] sm:$0xff]
        %v246 = vld [vmem:[%s226 + $0x18] sm:$0xff]
        %v247 = vld [vmem:[%s226 + $0x20] sm:$0xff]
        %v248 = vld [vmem:[%s226 + $0x28] sm:$0xff]
        %v249 = vld [vmem:[%s226 + $0x30] sm:$0xff]
        %v250 = vld [vmem:[%s226 + $0x38] sm:$0xff]
        %v251 = vld [vmem:[%s226 + $0x40] sm:$0xff]
        %v252 = vld [vmem:[%s226 + $0x48] sm:$0xff]
        %v253 = vld [vmem:[%s226 + $0x50] sm:$0xff]
        %v254 = vld [vmem:[%s226 + $0x58] sm:$0xff]
        %v255 = vld [vmem:[%s226 + $0x60] sm:$0xff]
        %v256 = vld [vmem:[%s226 + $0x68] sm:$0xff]
        %v257 = vld [vmem:[%s226 + $0x70] sm:$0xff]
        %v258 = vld [vmem:[%s226 + $0x78] sm:$0xff]
        %v259 = vld [vmem:[%s226 + $0x80] sm:$0xff]
        %v260 = vld [vmem:[%s226 + $0x88] sm:$0xff]
        %v261 = vld [vmem:[%s226 + $0x90] sm:$0xff]
        %v262 = vld [vmem:[%s226 + $0x98] sm:$0xff]
        %v263 = vld [vmem:[%s226 + $0xa0] sm:$0xff]
        %v264 = vld [vmem:[%s226 + $0xa8] sm:$0xff]
        %v265 = vld [vmem:[%s226 + $0xb0] sm:$0xff]
        %v266 = vld [vmem:[%s226 + $0xb8] sm:$0xff]
        %v267 = vld [vmem:[%s226 + $0xc0] sm:$0xff]
        %v268 = vld [vmem:[%s226 + $0xc8] sm:$0xff]
        %v269 = vld [vmem:[%s226 + $0xd0] sm:$0xff]
        %v270 = vld [vmem:[%s226 + $0xd8] sm:$0xff]
        %v271 = vld [vmem:[%s226 + $0xe0] sm:$0xff]
        %v272 = vld [vmem:[%s226 + $0xe8] sm:$0xff]
        %v273 = vld [vmem:[%s226 + $0xf0] sm:$0xff]
        %v274 = vld [vmem:[%s226 + $0xf8] sm:$0xff]
        %v275 = vld [vmem:[%s226 + $0x100] sm:$0xff]
        %v276 = vld [vmem:[%s226 + $0x108] sm:$0xff]
        %v277 = vld [vmem:[%s226 + $0x110] sm:$0xff]
        %v278 = vld [vmem:[%s226 + $0x118] sm:$0xff]
        %v279 = vld [vmem:[%s226 + $0x120] sm:$0xff]
        %v280 = vld [vmem:[%s226 + $0x128] sm:$0xff]
        %v281 = vld [vmem:[%s226 + $0x130] sm:$0xff]
        %v282 = vld [vmem:[%s226 + $0x138] sm:$0xff]
        %v283 = vld [vmem:[%s226 + $0x140] sm:$0xff]
        %v284 = vld [vmem:[%s226 + $0x148] sm:$0xff]
        %v285 = vld [vmem:[%s226 + $0x150] sm:$0xff]
        %v286 = vld [vmem:[%s226 + $0x158] sm:$0xff]
        %v287 = vld [vmem:[%s226 + $0x160] sm:$0xff]
        %v288 = vld [vmem:[%s226 + $0x168] sm:$0xff]
        %v289 = vld [vmem:[%s226 + $0x170] sm:$0xff]
        %v290 = vld [vmem:[%s226 + $0x178] sm:$0xff]
        %v291 = vld [vmem:[%s226 + $0x180] sm:$0xff]
        %v292 = vld [vmem:[%s226 + $0x188] sm:$0xff]
        %v293 = vld [vmem:[%s226 + $0x190] sm:$0xff]
        %v294 = vld [vmem:[%s226 + $0x198] sm:$0xff]
        %v295 = vld [vmem:[%s226 + $0x1a0] sm:$0xff]
        %v296 = vld [vmem:[%s226 + $0x1a8] sm:$0xff]
        %v297 = vld [vmem:[%s226 + $0x1b0] sm:$0xff]
        %v298 = vld [vmem:[%s226 + $0x1b8] sm:$0xff]
        %v299 = vld [vmem:[%s226 + $0x1c0] sm:$0xff]
        %v300 = vld [vmem:[%s226 + $0x1c8] sm:$0xff]
        %v301 = vld [vmem:[%s226 + $0x1d0] sm:$0xff]
        %v302 = vld [vmem:[%s226 + $0x1d8] sm:$0xff]
        %v303 = vld [vmem:[%s226 + $0x1e0] sm:$0xff]
        %v304 = vld [vmem:[%s226 + $0x1e8] sm:$0xff]
        %v305 = vld [vmem:[%s226 + $0x1f0] sm:$0xff]
        %v306 = vld [vmem:[%s226 + $0x1f8] sm:$0xff]
        %v307 = vld [vmem:[%s232] sm:$0xff]
        %v308 = vld [vmem:[%s232 + $0x8] sm:$0xff]
        %vm309 = vcmask 130048
        %v311 = vsel %vm309, %v243, 0
        %v314 = vsel %vm309, %v244, 0
        %v317 = vsel %vm309, %v245, 0
        %v320 = vsel %vm309, %v246, 0
        %v323 = vsel %vm309, %v247, 0
        %v326 = vsel %vm309, %v248, 0
        %v329 = vsel %vm309, %v249, 0
        %v332 = vsel %vm309, %v250, 0
        %v335 = vsel %vm309, %v251, 0
        %v338 = vsel %vm309, %v252, 0
        %v341 = vsel %vm309, %v253, 0
        %v344 = vsel %vm309, %v254, 0
        %v347 = vsel %vm309, %v255, 0
        %v350 = vsel %vm309, %v256, 0
        %v353 = vsel %vm309, %v257, 0
        %v356 = vsel %vm309, %v258, 0
        %v359 = vsel %vm309, %v259, 0
        %v362 = vsel %vm309, %v260, 0
        %v365 = vsel %vm309, %v261, 0
        %v368 = vsel %vm309, %v262, 0
        %v371 = vsel %vm309, %v263, 0
        %v374 = vsel %vm309, %v264, 0
        %v377 = vsel %vm309, %v265, 0
        %v380 = vsel %vm309, %v266, 0
        %v383 = vsel %vm309, %v267, 0
        %v386 = vsel %vm309, %v268, 0
        %v389 = vsel %vm309, %v269, 0
        %v392 = vsel %vm309, %v270, 0
        %v395 = vsel %vm309, %v271, 0
        %v398 = vsel %vm309, %v272, 0
        %v401 = vsel %vm309, %v273, 0
        %v404 = vsel %vm309, %v274, 0
        %v407 = vsel %vm309, %v275, 0
        %v410 = vsel %vm309, %v276, 0
        %v413 = vsel %vm309, %v277, 0
        %v416 = vsel %vm309, %v278, 0
        %v419 = vsel %vm309, %v279, 0
        %v422 = vsel %vm309, %v280, 0
        %v425 = vsel %vm309, %v281, 0
        %v428 = vsel %vm309, %v282, 0
        %v431 = vsel %vm309, %v283, 0
        %v434 = vsel %vm309, %v284, 0
        %v437 = vsel %vm309, %v285, 0
        %v440 = vsel %vm309, %v286, 0
        %v443 = vsel %vm309, %v287, 0
        %v446 = vsel %vm309, %v288, 0
        %v449 = vsel %vm309, %v289, 0
        %v452 = vsel %vm309, %v290, 0
        %v455 = vsel %vm309, %v291, 0
        %v458 = vsel %vm309, %v292, 0
        %v461 = vsel %vm309, %v293, 0
        %v464 = vsel %vm309, %v294, 0
        %v467 = vsel %vm309, %v295, 0
        %v470 = vsel %vm309, %v296, 0
        %v473 = vsel %vm309, %v297, 0
        %v476 = vsel %vm309, %v298, 0
        %v479 = vsel %vm309, %v299, 0
        %v482 = vsel %vm309, %v300, 0
        %v485 = vsel %vm309, %v301, 0
        %v488 = vsel %vm309, %v302, 0
        %v491 = vsel %vm309, %v303, 0
        %v494 = vsel %vm309, %v304, 0
        %v497 = vsel %vm309, %v305, 0
        %v500 = vsel %vm309, %v306, 0
        %502 = vmatprep.subr.mxu0 0.0
        %503 = vmatpush1.msra.mxu0 0.0
        %504 = vmatprep.subr.mxu0 0.0
        %505 = vmatpush1.msra.mxu0 0.0
        %506 = vmatprep.subr.mxu0 0.0
        %507 = vmatpush1.msra.mxu0 0.0
        %508 = vmatprep.subr.mxu0 0.0
        %509 = vmatpush1.msra.mxu0 0.0
        %510 = vmatprep.subr.mxu0 0.0
        %511 = vmatpush1.msra.mxu0 0.0
        %512 = vmatprep.subr.mxu0 0.0
        %513 = vmatpush1.msra.mxu0 0.0
        %514 = vmatprep.subr.mxu0 0.0
        %515 = vmatpush1.msra.mxu0 0.0
        %516 = vmatprep.subr.mxu0 0.0
        %517 = vmatpush1.msra.mxu0 0.0
        %518 = vmatprep.subr.mxu0 0.0
        %519 = vmatpush1.msra.mxu0 0.0
        %520 = vmatprep.subr.mxu0 0.0
        %521 = vmatpush1.msra.mxu0 0.0
        %522 = vmatprep.subr.mxu0 0.0
        %523 = vmatpush1.msra.mxu0 0.0
        %524 = vmatprep.subr.mxu0 0.0
        %525 = vmatpush1.msra.mxu0 0.0
        %526 = vmatprep.subr.mxu0 0.0
        %527 = vmatpush1.msra.mxu0 0.0
        %528 = vmatprep.subr.mxu0 0.0
        %529 = vmatpush1.msra.mxu0 0.0
        %530 = vmatprep.subr.mxu0 0.0
        %531 = vmatpush1.msra.mxu0 %v308
        %532 = vmatprep.subr.mxu0 0.0
        %533 = vmatpush1.msra.mxu0 %v307
        %534 = vmatprep.subr.mxu0 0.0
        %535 = vmatpush2.msra.mxu0 0.0
        %536 = vmatprep.subr.mxu0 0.0
        %537 = vmatpush2.msra.mxu0 0.0
        %538 = vmatprep.subr.mxu0 0.0
        %539 = vmatpush2.msra.mxu0 0.0
        %540 = vmatprep.subr.mxu0 0.0
        %541 = vmatpush2.msra.mxu0 0.0
        %542 = vmatprep.subr.mxu0 0.0
        %543 = vmatpush2.msra.mxu0 0.0
        %544 = vmatprep.subr.mxu0 0.0
        %545 = vmatpush2.msra.mxu0 0.0
        %546 = vmatprep.subr.mxu0 0.0
        %547 = vmatpush2.msra.mxu0 0.0
        %548 = vmatprep.subr.mxu0 0.0
        %549 = vmatpush2.msra.mxu0 0.0
        %550 = vmatprep.subr.mxu0 0.0
        %551 = vmatpush2.msra.mxu0 0.0
        %552 = vmatprep.subr.mxu0 0.0
        %553 = vmatpush2.msra.mxu0 0.0
        %554 = vmatprep.subr.mxu0 0.0
        %555 = vmatpush2.msra.mxu0 0.0
        %556 = vmatprep.subr.mxu0 0.0
        %557 = vmatpush2.msra.mxu0 0.0
        %558 = vmatprep.subr.mxu0 0.0
        %559 = vmatpush2.msra.mxu0 0.0
        %560 = vmatprep.subr.mxu0 0.0
        %561 = vmatpush2.msra.mxu0 0.0
        %562 = vmatprep.subr.mxu0 0.0
        %563 = vmatpush2.msra.mxu0 0.0
        %564 = vmatprep.subr.mxu0 0.0
        %565 = vmatpush2.msra.mxu0 0.0
        %566 = vmatprep.mubr.f32.mxu0 0.0
        %567 = vmatmul.mubr.f32.gmra.mxu0 %v311
        %v568 = vpop.f32.mrf.mxu0
        %v569 = vadd.f32 0.0, %v568
        %v570 = vpop.f32.mrf.mxu0
        %571 = vmatprep.mubr.f32.mxu0 0.0
        %572 = vmatmul.mubr.f32.gmra.mxu0 %v314
        %v573 = vpop.f32.mrf.mxu0
        %v574 = vadd.f32 0.0, %v573
        %v575 = vpop.f32.mrf.mxu0
        %576 = vmatprep.mubr.f32.mxu0 0.0
        %577 = vmatmul.mubr.f32.gmra.mxu0 %v317
        %v578 = vpop.f32.mrf.mxu0
        %v579 = vadd.f32 0.0, %v578
        %v580 = vpop.f32.mrf.mxu0
        %581 = vmatprep.mubr.f32.mxu0 0.0
        %582 = vmatmul.mubr.f32.gmra.mxu0 %v320
        %v583 = vpop.f32.mrf.mxu0
        %v584 = vadd.f32 0.0, %v583
        %v585 = vpop.f32.mrf.mxu0
        %586 = vmatprep.mubr.f32.mxu0 0.0
        %587 = vmatmul.mubr.f32.gmra.mxu0 %v323
        %v588 = vpop.f32.mrf.mxu0
        %v589 = vadd.f32 0.0, %v588
        %v590 = vpop.f32.mrf.mxu0
        %591 = vmatprep.mubr.f32.mxu0 0.0
        %592 = vmatmul.mubr.f32.gmra.mxu0 %v326
        %v593 = vpop.f32.mrf.mxu0
        %v594 = vadd.f32 0.0, %v593
        %v595 = vpop.f32.mrf.mxu0
        %596 = vmatprep.mubr.f32.mxu0 0.0
        %597 = vmatmul.mubr.f32.gmra.mxu0 %v329
        %v598 = vpop.f32.mrf.mxu0
        %v599 = vadd.f32 0.0, %v598
        %v600 = vpop.f32.mrf.mxu0
        %601 = vmatprep.mubr.f32.mxu0 0.0
        %602 = vmatmul.mubr.f32.gmra.mxu0 %v332
        %v603 = vpop.f32.mrf.mxu0
        %v604 = vadd.f32 0.0, %v603
        %v605 = vpop.f32.mrf.mxu0
        %606 = vmatprep.mubr.f32.mxu0 0.0
        %607 = vmatmul.mubr.f32.gmra.mxu0 %v335
        %v608 = vpop.f32.mrf.mxu0
        %v609 = vadd.f32 0.0, %v608
        %v610 = vpop.f32.mrf.mxu0
        %611 = vmatprep.mubr.f32.mxu0 0.0
        %612 = vmatmul.mubr.f32.gmra.mxu0 %v338
        %v613 = vpop.f32.mrf.mxu0
        %v614 = vadd.f32 0.0, %v613
        %v615 = vpop.f32.mrf.mxu0
        %616 = vmatprep.mubr.f32.mxu0 0.0
        %617 = vmatmul.mubr.f32.gmra.mxu0 %v341
        %v618 = vpop.f32.mrf.mxu0
        %v619 = vadd.f32 0.0, %v618
        %v620 = vpop.f32.mrf.mxu0
        %621 = vmatprep.mubr.f32.mxu0 0.0
        %622 = vmatmul.mubr.f32.gmra.mxu0 %v344
        %v623 = vpop.f32.mrf.mxu0
        %v624 = vadd.f32 0.0, %v623
        %v625 = vpop.f32.mrf.mxu0
        %626 = vmatprep.mubr.f32.mxu0 0.0
        %627 = vmatmul.mubr.f32.gmra.mxu0 %v347
        %v628 = vpop.f32.mrf.mxu0
        %v629 = vadd.f32 0.0, %v628
        %v630 = vpop.f32.mrf.mxu0
        %631 = vmatprep.mubr.f32.mxu0 0.0
        %632 = vmatmul.mubr.f32.gmra.mxu0 %v350
        %v633 = vpop.f32.mrf.mxu0
        %v634 = vadd.f32 0.0, %v633
        %v635 = vpop.f32.mrf.mxu0
        %636 = vmatprep.mubr.f32.mxu0 0.0
        %637 = vmatmul.mubr.f32.gmra.mxu0 %v353
        %v638 = vpop.f32.mrf.mxu0
        %v639 = vadd.f32 0.0, %v638
        %v640 = vpop.f32.mrf.mxu0
        %641 = vmatprep.mubr.f32.mxu0 0.0
        %642 = vmatmul.mubr.f32.gmra.mxu0 %v356
        %v643 = vpop.f32.mrf.mxu0
        %v644 = vadd.f32 0.0, %v643
        %v645 = vpop.f32.mrf.mxu0
        %646 = vmatprep.mubr.f32.mxu0 0.0
        %647 = vmatmul.mubr.f32.gmra.mxu0 %v359
        %v648 = vpop.f32.mrf.mxu0
        %v649 = vadd.f32 0.0, %v648
        %v650 = vpop.f32.mrf.mxu0
        %651 = vmatprep.mubr.f32.mxu0 0.0
        %652 = vmatmul.mubr.f32.gmra.mxu0 %v362
        %v653 = vpop.f32.mrf.mxu0
        %v654 = vadd.f32 0.0, %v653
        %v655 = vpop.f32.mrf.mxu0
        %656 = vmatprep.mubr.f32.mxu0 0.0
        %657 = vmatmul.mubr.f32.gmra.mxu0 %v365
        %v658 = vpop.f32.mrf.mxu0
        %v659 = vadd.f32 0.0, %v658
        %v660 = vpop.f32.mrf.mxu0
        %661 = vmatprep.mubr.f32.mxu0 0.0
        %662 = vmatmul.mubr.f32.gmra.mxu0 %v368
        %v663 = vpop.f32.mrf.mxu0
        %v664 = vadd.f32 0.0, %v663
        %v665 = vpop.f32.mrf.mxu0
        %666 = vmatprep.mubr.f32.mxu0 0.0
        %667 = vmatmul.mubr.f32.gmra.mxu0 %v371
        %v668 = vpop.f32.mrf.mxu0
        %v669 = vadd.f32 0.0, %v668
        %v670 = vpop.f32.mrf.mxu0
        %671 = vmatprep.mubr.f32.mxu0 0.0
        %672 = vmatmul.mubr.f32.gmra.mxu0 %v374
        %v673 = vpop.f32.mrf.mxu0
        %v674 = vadd.f32 0.0, %v673
        %v675 = vpop.f32.mrf.mxu0
        %676 = vmatprep.mubr.f32.mxu0 0.0
        %677 = vmatmul.mubr.f32.gmra.mxu0 %v377
        %v678 = vpop.f32.mrf.mxu0
        %v679 = vadd.f32 0.0, %v678
        %v680 = vpop.f32.mrf.mxu0
        %681 = vmatprep.mubr.f32.mxu0 0.0
        %682 = vmatmul.mubr.f32.gmra.mxu0 %v380
        %v683 = vpop.f32.mrf.mxu0
        %v684 = vadd.f32 0.0, %v683
        %v685 = vpop.f32.mrf.mxu0
        %686 = vmatprep.mubr.f32.mxu0 0.0
        %687 = vmatmul.mubr.f32.gmra.mxu0 %v383
        %v688 = vpop.f32.mrf.mxu0
        %v689 = vadd.f32 0.0, %v688
        %v690 = vpop.f32.mrf.mxu0
        %691 = vmatprep.mubr.f32.mxu0 0.0
        %692 = vmatmul.mubr.f32.gmra.mxu0 %v386
        %v693 = vpop.f32.mrf.mxu0
        %v694 = vadd.f32 0.0, %v693
        %v695 = vpop.f32.mrf.mxu0
        %696 = vmatprep.mubr.f32.mxu0 0.0
        %697 = vmatmul.mubr.f32.gmra.mxu0 %v389
        %v698 = vpop.f32.mrf.mxu0
        %v699 = vadd.f32 0.0, %v698
        %v700 = vpop.f32.mrf.mxu0
        %701 = vmatprep.mubr.f32.mxu0 0.0
        %702 = vmatmul.mubr.f32.gmra.mxu0 %v392
        %v703 = vpop.f32.mrf.mxu0
        %v704 = vadd.f32 0.0, %v703
        %v705 = vpop.f32.mrf.mxu0
        %706 = vmatprep.mubr.f32.mxu0 0.0
        %707 = vmatmul.mubr.f32.gmra.mxu0 %v395
        %v708 = vpop.f32.mrf.mxu0
        %v709 = vadd.f32 0.0, %v708
        %v710 = vpop.f32.mrf.mxu0
        %711 = vmatprep.mubr.f32.mxu0 0.0
        %712 = vmatmul.mubr.f32.gmra.mxu0 %v398
        %v713 = vpop.f32.mrf.mxu0
        %v714 = vadd.f32 0.0, %v713
        %v715 = vpop.f32.mrf.mxu0
        %716 = vmatprep.mubr.f32.mxu0 0.0
        %717 = vmatmul.mubr.f32.gmra.mxu0 %v401
        %v718 = vpop.f32.mrf.mxu0
        %v719 = vadd.f32 0.0, %v718
        %v720 = vpop.f32.mrf.mxu0
        %721 = vmatprep.mubr.f32.mxu0 0.0
        %722 = vmatmul.mubr.f32.gmra.mxu0 %v404
        %v723 = vpop.f32.mrf.mxu0
        %v724 = vadd.f32 0.0, %v723
        %v725 = vpop.f32.mrf.mxu0
        %726 = vmatprep.mubr.f32.mxu0 0.0
        %727 = vmatmul.mubr.f32.gmra.mxu0 %v407
        %v728 = vpop.f32.mrf.mxu0
        %v729 = vadd.f32 0.0, %v728
        %v730 = vpop.f32.mrf.mxu0
        %731 = vmatprep.mubr.f32.mxu0 0.0
        %732 = vmatmul.mubr.f32.gmra.mxu0 %v410
        %v733 = vpop.f32.mrf.mxu0
        %v734 = vadd.f32 0.0, %v733
        %v735 = vpop.f32.mrf.mxu0
        %736 = vmatprep.mubr.f32.mxu0 0.0
        %737 = vmatmul.mubr.f32.gmra.mxu0 %v413
        %v738 = vpop.f32.mrf.mxu0
        %v739 = vadd.f32 0.0, %v738
        %v740 = vpop.f32.mrf.mxu0
        %741 = vmatprep.mubr.f32.mxu0 0.0
        %742 = vmatmul.mubr.f32.gmra.mxu0 %v416
        %v743 = vpop.f32.mrf.mxu0
        %v744 = vadd.f32 0.0, %v743
        %v745 = vpop.f32.mrf.mxu0
        %746 = vmatprep.mubr.f32.mxu0 0.0
        %747 = vmatmul.mubr.f32.gmra.mxu0 %v419
        %v748 = vpop.f32.mrf.mxu0
        %v749 = vadd.f32 0.0, %v748
        %v750 = vpop.f32.mrf.mxu0
        %751 = vmatprep.mubr.f32.mxu0 0.0
        %752 = vmatmul.mubr.f32.gmra.mxu0 %v422
        %v753 = vpop.f32.mrf.mxu0
        %v754 = vadd.f32 0.0, %v753
        %v755 = vpop.f32.mrf.mxu0
        %756 = vmatprep.mubr.f32.mxu0 0.0
        %757 = vmatmul.mubr.f32.gmra.mxu0 %v425
        %v758 = vpop.f32.mrf.mxu0
        %v759 = vadd.f32 0.0, %v758
        %v760 = vpop.f32.mrf.mxu0
        %761 = vmatprep.mubr.f32.mxu0 0.0
        %762 = vmatmul.mubr.f32.gmra.mxu0 %v428
        %v763 = vpop.f32.mrf.mxu0
        %v764 = vadd.f32 0.0, %v763
        %v765 = vpop.f32.mrf.mxu0
        %766 = vmatprep.mubr.f32.mxu0 0.0
        %767 = vmatmul.mubr.f32.gmra.mxu0 %v431
        %v768 = vpop.f32.mrf.mxu0
        %v769 = vadd.f32 0.0, %v768
        %v770 = vpop.f32.mrf.mxu0
        %771 = vmatprep.mubr.f32.mxu0 0.0
        %772 = vmatmul.mubr.f32.gmra.mxu0 %v434
        %v773 = vpop.f32.mrf.mxu0
        %v774 = vadd.f32 0.0, %v773
        %v775 = vpop.f32.mrf.mxu0
        %776 = vmatprep.mubr.f32.mxu0 0.0
        %777 = vmatmul.mubr.f32.gmra.mxu0 %v437
        %v778 = vpop.f32.mrf.mxu0
        %v779 = vadd.f32 0.0, %v778
        %v780 = vpop.f32.mrf.mxu0
        %781 = vmatprep.mubr.f32.mxu0 0.0
        %782 = vmatmul.mubr.f32.gmra.mxu0 %v440
        %v783 = vpop.f32.mrf.mxu0
        %v784 = vadd.f32 0.0, %v783
        %v785 = vpop.f32.mrf.mxu0
        %786 = vmatprep.mubr.f32.mxu0 0.0
        %787 = vmatmul.mubr.f32.gmra.mxu0 %v443
        %v788 = vpop.f32.mrf.mxu0
        %v789 = vadd.f32 0.0, %v788
        %v790 = vpop.f32.mrf.mxu0
        %791 = vmatprep.mubr.f32.mxu0 0.0
        %792 = vmatmul.mubr.f32.gmra.mxu0 %v446
        %v793 = vpop.f32.mrf.mxu0
        %v794 = vadd.f32 0.0, %v793
        %v795 = vpop.f32.mrf.mxu0
        %796 = vmatprep.mubr.f32.mxu0 0.0
        %797 = vmatmul.mubr.f32.gmra.mxu0 %v449
        %v798 = vpop.f32.mrf.mxu0
        %v799 = vadd.f32 0.0, %v798
        %v800 = vpop.f32.mrf.mxu0
        %801 = vmatprep.mubr.f32.mxu0 0.0
        %802 = vmatmul.mubr.f32.gmra.mxu0 %v452
        %v803 = vpop.f32.mrf.mxu0
        %v804 = vadd.f32 0.0, %v803
        %v805 = vpop.f32.mrf.mxu0
        %806 = vmatprep.mubr.f32.mxu0 0.0
        %807 = vmatmul.mubr.f32.gmra.mxu0 %v455
        %v808 = vpop.f32.mrf.mxu0
        %v809 = vadd.f32 0.0, %v808
        %v810 = vpop.f32.mrf.mxu0
        %811 = vmatprep.mubr.f32.mxu0 0.0
        %812 = vmatmul.mubr.f32.gmra.mxu0 %v458
        %v813 = vpop.f32.mrf.mxu0
        %v814 = vadd.f32 0.0, %v813
        %v815 = vpop.f32.mrf.mxu0
        %816 = vmatprep.mubr.f32.mxu0 0.0
        %817 = vmatmul.mubr.f32.gmra.mxu0 %v461
        %v818 = vpop.f32.mrf.mxu0
        %v819 = vadd.f32 0.0, %v818
        %v820 = vpop.f32.mrf.mxu0
        %821 = vmatprep.mubr.f32.mxu0 0.0
        %822 = vmatmul.mubr.f32.gmra.mxu0 %v464
        %v823 = vpop.f32.mrf.mxu0
        %v824 = vadd.f32 0.0, %v823
        %v825 = vpop.f32.mrf.mxu0
        %826 = vmatprep.mubr.f32.mxu0 0.0
        %827 = vmatmul.mubr.f32.gmra.mxu0 %v467
        %v828 = vpop.f32.mrf.mxu0
        %v829 = vadd.f32 0.0, %v828
        %v830 = vpop.f32.mrf.mxu0
        %831 = vmatprep.mubr.f32.mxu0 0.0
        %832 = vmatmul.mubr.f32.gmra.mxu0 %v470
        %v833 = vpop.f32.mrf.mxu0
        %v834 = vadd.f32 0.0, %v833
        %v835 = vpop.f32.mrf.mxu0
        %836 = vmatprep.mubr.f32.mxu0 0.0
        %837 = vmatmul.mubr.f32.gmra.mxu0 %v473
        %v838 = vpop.f32.mrf.mxu0
        %v839 = vadd.f32 0.0, %v838
        %v840 = vpop.f32.mrf.mxu0
        %841 = vmatprep.mubr.f32.mxu0 0.0
        %842 = vmatmul.mubr.f32.gmra.mxu0 %v476
        %v843 = vpop.f32.mrf.mxu0
        %v844 = vadd.f32 0.0, %v843
        %v845 = vpop.f32.mrf.mxu0
        %846 = vmatprep.mubr.f32.mxu0 0.0
        %847 = vmatmul.mubr.f32.gmra.mxu0 %v479
        %v848 = vpop.f32.mrf.mxu0
        %v849 = vadd.f32 0.0, %v848
        %v850 = vpop.f32.mrf.mxu0
        %851 = vmatprep.mubr.f32.mxu0 0.0
        %852 = vmatmul.mubr.f32.gmra.mxu0 %v482
        %v853 = vpop.f32.mrf.mxu0
        %v854 = vadd.f32 0.0, %v853
        %v855 = vpop.f32.mrf.mxu0
        %856 = vmatprep.mubr.f32.mxu0 0.0
        %857 = vmatmul.mubr.f32.gmra.mxu0 %v485
        %v858 = vpop.f32.mrf.mxu0
        %v859 = vadd.f32 0.0, %v858
        %v860 = vpop.f32.mrf.mxu0
        %861 = vmatprep.mubr.f32.mxu0 0.0
        %862 = vmatmul.mubr.f32.gmra.mxu0 %v488
        %v863 = vpop.f32.mrf.mxu0
        %v864 = vadd.f32 0.0, %v863
        %v865 = vpop.f32.mrf.mxu0
        %866 = vmatprep.mubr.f32.mxu0 0.0
        %867 = vmatmul.mubr.f32.gmra.mxu0 %v491
        %v868 = vpop.f32.mrf.mxu0
        %v869 = vadd.f32 0.0, %v868
        %v870 = vpop.f32.mrf.mxu0
        %871 = vmatprep.mubr.f32.mxu0 0.0
        %872 = vmatmul.mubr.f32.gmra.mxu0 %v494
        %v873 = vpop.f32.mrf.mxu0
        %v874 = vadd.f32 0.0, %v873
        %v875 = vpop.f32.mrf.mxu0
        %876 = vmatprep.mubr.f32.mxu0 0.0
        %877 = vmatmul.mubr.f32.gmra.mxu0 %v497
        %v878 = vpop.f32.mrf.mxu0
        %v879 = vadd.f32 0.0, %v878
        %v880 = vpop.f32.mrf.mxu0
        %881 = vmatprep.mubr.f32.mxu0 0.0
        %882 = vmatmul.mubr.f32.gmra.mxu0 %v500
        %v883 = vpop.f32.mrf.mxu0
        %v884 = vadd.f32 0.0, %v883
        %v885 = vpop.f32.mrf.mxu0
        %886 = vdwg.mxu0
        %vm887 = vcmask 64512
        %888 = vst.msk [vmem:[%s241] sm:$0xff] %vm887, %v569
        %889 = vst.msk [vmem:[%s241 + $0x8] sm:$0xff] %vm887, %v574
        %890 = vst.msk [vmem:[%s241 + $0x10] sm:$0xff] %vm887, %v579
        %891 = vst.msk [vmem:[%s241 + $0x18] sm:$0xff] %vm887, %v584
        %892 = vst.msk [vmem:[%s241 + $0x20] sm:$0xff] %vm887, %v589
        %893 = vst.msk [vmem:[%s241 + $0x28] sm:$0xff] %vm887, %v594
        %894 = vst.msk [vmem:[%s241 + $0x30] sm:$0xff] %vm887, %v599
        %895 = vst.msk [vmem:[%s241 + $0x38] sm:$0xff] %vm887, %v604
        %896 = vst.msk [vmem:[%s241 + $0x40] sm:$0xff] %vm887, %v609
        %897 = vst.msk [vmem:[%s241 + $0x48] sm:$0xff] %vm887, %v614
        %898 = vst.msk [vmem:[%s241 + $0x50] sm:$0xff] %vm887, %v619
        %899 = vst.msk [vmem:[%s241 + $0x58] sm:$0xff] %vm887, %v624
        %900 = vst.msk [vmem:[%s241 + $0x60] sm:$0xff] %vm887, %v629
        %901 = vst.msk [vmem:[%s241 + $0x68] sm:$0xff] %vm887, %v634
        %902 = vst.msk [vmem:[%s241 + $0x70] sm:$0xff] %vm887, %v639
        %903 = vst.msk [vmem:[%s241 + $0x78] sm:$0xff] %vm887, %v644
        %904 = vst.msk [vmem:[%s241 + $0x80] sm:$0xff] %vm887, %v649
        %905 = vst.msk [vmem:[%s241 + $0x88] sm:$0xff] %vm887, %v654
        %906 = vst.msk [vmem:[%s241 + $0x90] sm:$0xff] %vm887, %v659
        %907 = vst.msk [vmem:[%s241 + $0x98] sm:$0xff] %vm887, %v664
        %908 = vst.msk [vmem:[%s241 + $0xa0] sm:$0xff] %vm887, %v669
        %909 = vst.msk [vmem:[%s241 + $0xa8] sm:$0xff] %vm887, %v674
        %910 = vst.msk [vmem:[%s241 + $0xb0] sm:$0xff] %vm887, %v679
        %911 = vst.msk [vmem:[%s241 + $0xb8] sm:$0xff] %vm887, %v684
        %912 = vst.msk [vmem:[%s241 + $0xc0] sm:$0xff] %vm887, %v689
        %913 = vst.msk [vmem:[%s241 + $0xc8] sm:$0xff] %vm887, %v694
        %914 = vst.msk [vmem:[%s241 + $0xd0] sm:$0xff] %vm887, %v699
        %915 = vst.msk [vmem:[%s241 + $0xd8] sm:$0xff] %vm887, %v704
        %916 = vst.msk [vmem:[%s241 + $0xe0] sm:$0xff] %vm887, %v709
        %917 = vst.msk [vmem:[%s241 + $0xe8] sm:$0xff] %vm887, %v714
        %918 = vst.msk [vmem:[%s241 + $0xf0] sm:$0xff] %vm887, %v719
        %919 = vst.msk [vmem:[%s241 + $0xf8] sm:$0xff] %vm887, %v724
        %920 = vst.msk [vmem:[%s241 + $0x100] sm:$0xff] %vm887, %v729
        %921 = vst.msk [vmem:[%s241 + $0x108] sm:$0xff] %vm887, %v734
        %922 = vst.msk [vmem:[%s241 + $0x110] sm:$0xff] %vm887, %v739
        %923 = vst.msk [vmem:[%s241 + $0x118] sm:$0xff] %vm887, %v744
        %924 = vst.msk [vmem:[%s241 + $0x120] sm:$0xff] %vm887, %v749
        %925 = vst.msk [vmem:[%s241 + $0x128] sm:$0xff] %vm887, %v754
        %926 = vst.msk [vmem:[%s241 + $0x130] sm:$0xff] %vm887, %v759
        %927 = vst.msk [vmem:[%s241 + $0x138] sm:$0xff] %vm887, %v764
        %928 = vst.msk [vmem:[%s241 + $0x140] sm:$0xff] %vm887, %v769
        %929 = vst.msk [vmem:[%s241 + $0x148] sm:$0xff] %vm887, %v774
        %930 = vst.msk [vmem:[%s241 + $0x150] sm:$0xff] %vm887, %v779
        %931 = vst.msk [vmem:[%s241 + $0x158] sm:$0xff] %vm887, %v784
        %932 = vst.msk [vmem:[%s241 + $0x160] sm:$0xff] %vm887, %v789
        %933 = vst.msk [vmem:[%s241 + $0x168] sm:$0xff] %vm887, %v794
        %934 = vst.msk [vmem:[%s241 + $0x170] sm:$0xff] %vm887, %v799
        %935 = vst.msk [vmem:[%s241 + $0x178] sm:$0xff] %vm887, %v804
        %936 = vst.msk [vmem:[%s241 + $0x180] sm:$0xff] %vm887, %v809
        %937 = vst.msk [vmem:[%s241 + $0x188] sm:$0xff] %vm887, %v814
        %938 = vst.msk [vmem:[%s241 + $0x190] sm:$0xff] %vm887, %v819
        %939 = vst.msk [vmem:[%s241 + $0x198] sm:$0xff] %vm887, %v824
        %940 = vst.msk [vmem:[%s241 + $0x1a0] sm:$0xff] %vm887, %v829
        %941 = vst.msk [vmem:[%s241 + $0x1a8] sm:$0xff] %vm887, %v834
        %942 = vst.msk [vmem:[%s241 + $0x1b0] sm:$0xff] %vm887, %v839
        %943 = vst.msk [vmem:[%s241 + $0x1b8] sm:$0xff] %vm887, %v844
        %944 = vst.msk [vmem:[%s241 + $0x1c0] sm:$0xff] %vm887, %v849
        %945 = vst.msk [vmem:[%s241 + $0x1c8] sm:$0xff] %vm887, %v854
        %946 = vst.msk [vmem:[%s241 + $0x1d0] sm:$0xff] %vm887, %v859
        %947 = vst.msk [vmem:[%s241 + $0x1d8] sm:$0xff] %vm887, %v864
        %948 = vst.msk [vmem:[%s241 + $0x1e0] sm:$0xff] %vm887, %v869
        %949 = vst.msk [vmem:[%s241 + $0x1e8] sm:$0xff] %vm887, %v874
        %950 = vst.msk [vmem:[%s241 + $0x1f0] sm:$0xff] %vm887, %v879
        %951 = vst.msk [vmem:[%s241 + $0x1f8] sm:$0xff] %vm887, %v884
        %v952 = vsel %vm887, %v569, 0.0
        %v953 = vsel %vm887, %v574, 0.0
        %v954 = vadd.f32 %v952, %v953
        %v955 = vsel %vm887, %v579, 0.0
        %v956 = vadd.f32 %v954, %v955
        %v957 = vsel %vm887, %v584, 0.0
        %v958 = vadd.f32 %v956, %v957
        %v959 = vsel %vm887, %v589, 0.0
        %v960 = vadd.f32 %v958, %v959
        %v961 = vsel %vm887, %v594, 0.0
        %v962 = vadd.f32 %v960, %v961
        %v963 = vsel %vm887, %v599, 0.0
        %v964 = vadd.f32 %v962, %v963
        %v965 = vsel %vm887, %v604, 0.0
        %v966 = vadd.f32 %v964, %v965
        %v967 = vsel %vm887, %v609, 0.0
        %v968 = vadd.f32 %v966, %v967
        %v969 = vsel %vm887, %v614, 0.0
        %v970 = vadd.f32 %v968, %v969
        %v971 = vsel %vm887, %v619, 0.0
        %v972 = vadd.f32 %v970, %v971
        %v973 = vsel %vm887, %v624, 0.0
        %v974 = vadd.f32 %v972, %v973
        %v975 = vsel %vm887, %v629, 0.0
        %v976 = vadd.f32 %v974, %v975
        %v977 = vsel %vm887, %v634, 0.0
        %v978 = vadd.f32 %v976, %v977
        %v979 = vsel %vm887, %v639, 0.0
        %v980 = vadd.f32 %v978, %v979
        %v981 = vsel %vm887, %v644, 0.0
        %v982 = vadd.f32 %v980, %v981
        %v983 = vsel %vm887, %v649, 0.0
        %v984 = vadd.f32 %v982, %v983
        %v985 = vsel %vm887, %v654, 0.0
        %v986 = vadd.f32 %v984, %v985
        %v987 = vsel %vm887, %v659, 0.0
        %v988 = vadd.f32 %v986, %v987
        %v989 = vsel %vm887, %v664, 0.0
        %v990 = vadd.f32 %v988, %v989
        %v991 = vsel %vm887, %v669, 0.0
        %v992 = vadd.f32 %v990, %v991
        %v993 = vsel %vm887, %v674, 0.0
        %v994 = vadd.f32 %v992, %v993
        %v995 = vsel %vm887, %v679, 0.0
        %v996 = vadd.f32 %v994, %v995
        %v997 = vsel %vm887, %v684, 0.0
        %v998 = vadd.f32 %v996, %v997
        %v999 = vsel %vm887, %v689, 0.0
        %v1000 = vadd.f32 %v998, %v999
        %v1001 = vsel %vm887, %v694, 0.0
        %v1002 = vadd.f32 %v1000, %v1001
        %v1003 = vsel %vm887, %v699, 0.0
        %v1004 = vadd.f32 %v1002, %v1003
        %v1005 = vsel %vm887, %v704, 0.0
        %v1006 = vadd.f32 %v1004, %v1005
        %v1007 = vsel %vm887, %v709, 0.0
        %v1008 = vadd.f32 %v1006, %v1007
        %v1009 = vsel %vm887, %v714, 0.0
        %v1010 = vadd.f32 %v1008, %v1009
        %v1011 = vsel %vm887, %v719, 0.0
        %v1012 = vadd.f32 %v1010, %v1011
        %v1013 = vsel %vm887, %v724, 0.0
        %v1014 = vadd.f32 %v1012, %v1013
        %v1015 = vsel %vm887, %v729, 0.0
        %v1016 = vadd.f32 %v1014, %v1015
        %v1017 = vsel %vm887, %v734, 0.0
        %v1018 = vadd.f32 %v1016, %v1017
        %v1019 = vsel %vm887, %v739, 0.0
        %v1020 = vadd.f32 %v1018, %v1019
        %v1021 = vsel %vm887, %v744, 0.0
        %v1022 = vadd.f32 %v1020, %v1021
        %v1023 = vsel %vm887, %v749, 0.0
        %v1024 = vadd.f32 %v1022, %v1023
        %v1025 = vsel %vm887, %v754, 0.0
        %v1026 = vadd.f32 %v1024, %v1025
        %v1027 = vsel %vm887, %v759, 0.0
        %v1028 = vadd.f32 %v1026, %v1027
        %v1029 = vsel %vm887, %v764, 0.0
        %v1030 = vadd.f32 %v1028, %v1029
        %v1031 = vsel %vm887, %v769, 0.0
        %v1032 = vadd.f32 %v1030, %v1031
        %v1033 = vsel %vm887, %v774, 0.0
        %v1034 = vadd.f32 %v1032, %v1033
        %v1035 = vsel %vm887, %v779, 0.0
        %v1036 = vadd.f32 %v1034, %v1035
        %v1037 = vsel %vm887, %v784, 0.0
        %v1038 = vadd.f32 %v1036, %v1037
        %v1039 = vsel %vm887, %v789, 0.0
        %v1040 = vadd.f32 %v1038, %v1039
        %v1041 = vsel %vm887, %v794, 0.0
        %v1042 = vadd.f32 %v1040, %v1041
        %v1043 = vsel %vm887, %v799, 0.0
        %v1044 = vadd.f32 %v1042, %v1043
        %v1045 = vsel %vm887, %v804, 0.0
        %v1046 = vadd.f32 %v1044, %v1045
        %v1047 = vsel %vm887, %v809, 0.0
        %v1048 = vadd.f32 %v1046, %v1047
        %v1049 = vsel %vm887, %v814, 0.0
        %v1050 = vadd.f32 %v1048, %v1049
        %v1051 = vsel %vm887, %v819, 0.0
        %v1052 = vadd.f32 %v1050, %v1051
        %v1053 = vsel %vm887, %v824, 0.0
        %v1054 = vadd.f32 %v1052, %v1053
        %v1055 = vsel %vm887, %v829, 0.0
        %v1056 = vadd.f32 %v1054, %v1055
        %v1057 = vsel %vm887, %v834, 0.0
        %v1058 = vadd.f32 %v1056, %v1057
        %v1059 = vsel %vm887, %v839, 0.0
        %v1060 = vadd.f32 %v1058, %v1059
        %v1061 = vsel %vm887, %v844, 0.0
        %v1062 = vadd.f32 %v1060, %v1061
        %v1063 = vsel %vm887, %v849, 0.0
        %v1064 = vadd.f32 %v1062, %v1063
        %v1065 = vsel %vm887, %v854, 0.0
        %v1066 = vadd.f32 %v1064, %v1065
        %v1067 = vsel %vm887, %v859, 0.0
        %v1068 = vadd.f32 %v1066, %v1067
        %v1069 = vsel %vm887, %v864, 0.0
        %v1070 = vadd.f32 %v1068, %v1069
        %v1071 = vsel %vm887, %v869, 0.0
        %v1072 = vadd.f32 %v1070, %v1071
        %v1073 = vsel %vm887, %v874, 0.0
        %v1074 = vadd.f32 %v1072, %v1073
        %v1075 = vsel %vm887, %v879, 0.0
        %v1076 = vadd.f32 %v1074, %v1075
        %v1077 = vsel %vm887, %v884, 0.0
        %v1078 = vadd.f32 %v1076, %v1077
        %v1079 = vrot.slane %v1078, 4
        %v1080 = vadd.f32 %v1078, %v1079
        %v1081 = vrot.slane %v1080, 2
        %v1082 = vadd.f32 %v1080, %v1081
        %v1083 = vrot.slane %v1082, 1
        %v1084 = vadd.f32 %v1082, %v1083
        %v1085 = vmul.f32 %v569, %v569
        %v1086 = vmul.f32 %v574, %v574
        %v1087 = vmul.f32 %v579, %v579
        %v1088 = vmul.f32 %v584, %v584
        %v1089 = vmul.f32 %v589, %v589
        %v1090 = vmul.f32 %v594, %v594
        %v1091 = vmul.f32 %v599, %v599
        %v1092 = vmul.f32 %v604, %v604
        %v1093 = vmul.f32 %v609, %v609
        %v1094 = vmul.f32 %v614, %v614
        %v1095 = vmul.f32 %v619, %v619
        %v1096 = vmul.f32 %v624, %v624
        %v1097 = vmul.f32 %v629, %v629
        %v1098 = vmul.f32 %v634, %v634
        %v1099 = vmul.f32 %v639, %v639
        %v1100 = vmul.f32 %v644, %v644
        %v1101 = vmul.f32 %v649, %v649
        %v1102 = vmul.f32 %v654, %v654
        %v1103 = vmul.f32 %v659, %v659
        %v1104 = vmul.f32 %v664, %v664
        %v1105 = vmul.f32 %v669, %v669
        %v1106 = vmul.f32 %v674, %v674
        %v1107 = vmul.f32 %v679, %v679
        %v1108 = vmul.f32 %v684, %v684
        %v1109 = vmul.f32 %v689, %v689
        %v1110 = vmul.f32 %v694, %v694
        %v1111 = vmul.f32 %v699, %v699
        %v1112 = vmul.f32 %v704, %v704
        %v1113 = vmul.f32 %v709, %v709
        %v1114 = vmul.f32 %v714, %v714
        %v1115 = vmul.f32 %v719, %v719
        %v1116 = vmul.f32 %v724, %v724
        %v1117 = vmul.f32 %v729, %v729
        %v1118 = vmul.f32 %v734, %v734
        %v1119 = vmul.f32 %v739, %v739
        %v1120 = vmul.f32 %v744, %v744
        %v1121 = vmul.f32 %v749, %v749
        %v1122 = vmul.f32 %v754, %v754
        %v1123 = vmul.f32 %v759, %v759
        %v1124 = vmul.f32 %v764, %v764
        %v1125 = vmul.f32 %v769, %v769
        %v1126 = vmul.f32 %v774, %v774
        %v1127 = vmul.f32 %v779, %v779
        %v1128 = vmul.f32 %v784, %v784
        %v1129 = vmul.f32 %v789, %v789
        %v1130 = vmul.f32 %v794, %v794
        %v1131 = vmul.f32 %v799, %v799
        %v1132 = vmul.f32 %v804, %v804
        %v1133 = vmul.f32 %v809, %v809
        %v1134 = vmul.f32 %v814, %v814
        %v1135 = vmul.f32 %v819, %v819
        %v1136 = vmul.f32 %v824, %v824
        %v1137 = vmul.f32 %v829, %v829
        %v1138 = vmul.f32 %v834, %v834
        %v1139 = vmul.f32 %v839, %v839
        %v1140 = vmul.f32 %v844, %v844
        %v1141 = vmul.f32 %v849, %v849
        %v1142 = vmul.f32 %v854, %v854
        %v1143 = vmul.f32 %v859, %v859
        %v1144 = vmul.f32 %v864, %v864
        %v1145 = vmul.f32 %v869, %v869
        %v1146 = vmul.f32 %v874, %v874
        %v1147 = vmul.f32 %v879, %v879
        %v1148 = vmul.f32 %v884, %v884
        %v1149 = vsel %vm887, %v1085, 0.0
        %v1150 = vsel %vm887, %v1086, 0.0
        %v1151 = vadd.f32 %v1149, %v1150
        %v1152 = vsel %vm887, %v1087, 0.0
        %v1153 = vadd.f32 %v1151, %v1152
        %v1154 = vsel %vm887, %v1088, 0.0
        %v1155 = vadd.f32 %v1153, %v1154
        %v1156 = vsel %vm887, %v1089, 0.0
        %v1157 = vadd.f32 %v1155, %v1156
        %v1158 = vsel %vm887, %v1090, 0.0
        %v1159 = vadd.f32 %v1157, %v1158
        %v1160 = vsel %vm887, %v1091, 0.0
        %v1161 = vadd.f32 %v1159, %v1160
        %v1162 = vsel %vm887, %v1092, 0.0
        %v1163 = vadd.f32 %v1161, %v1162
        %v1164 = vsel %vm887, %v1093, 0.0
        %v1165 = vadd.f32 %v1163, %v1164
        %v1166 = vsel %vm887, %v1094, 0.0
        %v1167 = vadd.f32 %v1165, %v1166
        %v1168 = vsel %vm887, %v1095, 0.0
        %v1169 = vadd.f32 %v1167, %v1168
        %v1170 = vsel %vm887, %v1096, 0.0
        %v1171 = vadd.f32 %v1169, %v1170
        %v1172 = vsel %vm887, %v1097, 0.0
        %v1173 = vadd.f32 %v1171, %v1172
        %v1174 = vsel %vm887, %v1098, 0.0
        %v1175 = vadd.f32 %v1173, %v1174
        %v1176 = vsel %vm887, %v1099, 0.0
        %v1177 = vadd.f32 %v1175, %v1176
        %v1178 = vsel %vm887, %v1100, 0.0
        %v1179 = vadd.f32 %v1177, %v1178
        %v1180 = vsel %vm887, %v1101, 0.0
        %v1181 = vadd.f32 %v1179, %v1180
        %v1182 = vsel %vm887, %v1102, 0.0
        %v1183 = vadd.f32 %v1181, %v1182
        %v1184 = vsel %vm887, %v1103, 0.0
        %v1185 = vadd.f32 %v1183, %v1184
        %v1186 = vsel %vm887, %v1104, 0.0
        %v1187 = vadd.f32 %v1185, %v1186
        %v1188 = vsel %vm887, %v1105, 0.0
        %v1189 = vadd.f32 %v1187, %v1188
        %v1190 = vsel %vm887, %v1106, 0.0
        %v1191 = vadd.f32 %v1189, %v1190
        %v1192 = vsel %vm887, %v1107, 0.0
        %v1193 = vadd.f32 %v1191, %v1192
        %v1194 = vsel %vm887, %v1108, 0.0
        %v1195 = vadd.f32 %v1193, %v1194
        %v1196 = vsel %vm887, %v1109, 0.0
        %v1197 = vadd.f32 %v1195, %v1196
        %v1198 = vsel %vm887, %v1110, 0.0
        %v1199 = vadd.f32 %v1197, %v1198
        %v1200 = vsel %vm887, %v1111, 0.0
        %v1201 = vadd.f32 %v1199, %v1200
        %v1202 = vsel %vm887, %v1112, 0.0
        %v1203 = vadd.f32 %v1201, %v1202
        %v1204 = vsel %vm887, %v1113, 0.0
        %v1205 = vadd.f32 %v1203, %v1204
        %v1206 = vsel %vm887, %v1114, 0.0
        %v1207 = vadd.f32 %v1205, %v1206
        %v1208 = vsel %vm887, %v1115, 0.0
        %v1209 = vadd.f32 %v1207, %v1208
        %v1210 = vsel %vm887, %v1116, 0.0
        %v1211 = vadd.f32 %v1209, %v1210
        %v1212 = vsel %vm887, %v1117, 0.0
        %v1213 = vadd.f32 %v1211, %v1212
        %v1214 = vsel %vm887, %v1118, 0.0
        %v1215 = vadd.f32 %v1213, %v1214
        %v1216 = vsel %vm887, %v1119, 0.0
        %v1217 = vadd.f32 %v1215, %v1216
        %v1218 = vsel %vm887, %v1120, 0.0
        %v1219 = vadd.f32 %v1217, %v1218
        %v1220 = vsel %vm887, %v1121, 0.0
        %v1221 = vadd.f32 %v1219, %v1220
        %v1222 = vsel %vm887, %v1122, 0.0
        %v1223 = vadd.f32 %v1221, %v1222
        %v1224 = vsel %vm887, %v1123, 0.0
        %v1225 = vadd.f32 %v1223, %v1224
        %v1226 = vsel %vm887, %v1124, 0.0
        %v1227 = vadd.f32 %v1225, %v1226
        %v1228 = vsel %vm887, %v1125, 0.0
        %v1229 = vadd.f32 %v1227, %v1228
        %v1230 = vsel %vm887, %v1126, 0.0
        %v1231 = vadd.f32 %v1229, %v1230
        %v1232 = vsel %vm887, %v1127, 0.0
        %v1233 = vadd.f32 %v1231, %v1232
        %v1234 = vsel %vm887, %v1128, 0.0
        %v1235 = vadd.f32 %v1233, %v1234
        %v1236 = vsel %vm887, %v1129, 0.0
        %v1237 = vadd.f32 %v1235, %v1236
        %v1238 = vsel %vm887, %v1130, 0.0
        %v1239 = vadd.f32 %v1237, %v1238
        %v1240 = vsel %vm887, %v1131, 0.0
        %v1241 = vadd.f32 %v1239, %v1240
        %v1242 = vsel %vm887, %v1132, 0.0
        %v1243 = vadd.f32 %v1241, %v1242
        %v1244 = vsel %vm887, %v1133, 0.0
        %v1245 = vadd.f32 %v1243, %v1244
        %v1246 = vsel %vm887, %v1134, 0.0
        %v1247 = vadd.f32 %v1245, %v1246
        %v1248 = vsel %vm887, %v1135, 0.0
        %v1249 = vadd.f32 %v1247, %v1248
        %v1250 = vsel %vm887, %v1136, 0.0
        %v1251 = vadd.f32 %v1249, %v1250
        %v1252 = vsel %vm887, %v1137, 0.0
        %v1253 = vadd.f32 %v1251, %v1252
        %v1254 = vsel %vm887, %v1138, 0.0
        %v1255 = vadd.f32 %v1253, %v1254
        %v1256 = vsel %vm887, %v1139, 0.0
        %v1257 = vadd.f32 %v1255, %v1256
        %v1258 = vsel %vm887, %v1140, 0.0
        %v1259 = vadd.f32 %v1257, %v1258
        %v1260 = vsel %vm887, %v1141, 0.0
        %v1261 = vadd.f32 %v1259, %v1260
        %v1262 = vsel %vm887, %v1142, 0.0
        %v1263 = vadd.f32 %v1261, %v1262
        %v1264 = vsel %vm887, %v1143, 0.0
        %v1265 = vadd.f32 %v1263, %v1264
        %v1266 = vsel %vm887, %v1144, 0.0
        %v1267 = vadd.f32 %v1265, %v1266
        %v1268 = vsel %vm887, %v1145, 0.0
        %v1269 = vadd.f32 %v1267, %v1268
        %v1270 = vsel %vm887, %v1146, 0.0
        %v1271 = vadd.f32 %v1269, %v1270
        %v1272 = vsel %vm887, %v1147, 0.0
        %v1273 = vadd.f32 %v1271, %v1272
        %v1274 = vsel %vm887, %v1148, 0.0
        %v1275 = vadd.f32 %v1273, %v1274
        %v1276 = vrot.slane %v1275, 4
        %v1277 = vadd.f32 %v1275, %v1276
        %v1278 = vrot.slane %v1277, 2
        %v1279 = vadd.f32 %v1277, %v1278
        %v1280 = vrot.slane %v1279, 1
        %v1281 = vadd.f32 %v1279, %v1280
        %vm1282 = vcmask 1040384
        %v1283 = vsel %vm1282, %v1084, %v1281
        %vm1284 = vcmask 58368
        %1285 = vst.msk [vmem:[%s217] sm:$0x3] %vm1284, %v1283
        %s1286 = smul.u32 64, %s23
        %p1287 = scmp.lt.s32.totalorder %s22, 3
        %s1288 = scalar_select %p1287, %s22, 3
        %p1289 = scmp.lt.s32.totalorder %s1286, 63
        %s1290 = scalar_select %p1289, %s1286, 63
        %s1291 = smul.addr %s1288, 64
        %s1292 = sadd.s32 %s1290, %s1291
        %s1293 = smul.addr %s1292, 8
        %s1294 = scalar_lea.vmem %s2, %s1293
        %s1295 = sand.u32 %s122, 1
        %s1296 = scalar_lea.sflag [#allocation3], %s1295
        %s1297 = sand.u32 %s122, 1
        %s1298 = smul.addr %s1297, 2
        %s1299 = scalar_lea.vmem [#allocation2], %s1298
        // Predicated region
        $region29: #{tpu_custom_call.1} parent=27 // pred_check
          %p1300 = pneg %p104
        $region30: #{tpu_custom_call.1} parent=27 // pred_check_branch
          %1302 = sbr.rel (%p1300) target = $region32
        $region31: #{tpu_custom_call.1} parent=27 // pred_region
          %s1303 = smul.u32 64, %s23
        $region32: #{tpu_custom_call.1} parent=27 // pred_fallthru
          _
        // Predicated region
        $region33: #{tpu_custom_call.1} parent=27 // pred_check
          %p1304 = pneg %p132
        $region34: #{tpu_custom_call.1} parent=27 // pred_check_branch
          %1306 = sbr.rel (%p1304) target = $region36
        $region35: #{tpu_custom_call.1} parent=27 // pred_region
          %s1308 = ssub.s32 32, 32
          %1309 = vsyncadd %s1296, %s1308
          %s1310 = sadd.s32 %s23, %s22
          %s1311 = smul.addr %s1310, 32
          %s1312 = scalar_lea.hbm %s3, %s1311
          %s1314 = sshll.u32 %s1299, 4
          %s1315 = int_to_ptr.vmem [resolvable:$true] %s1314
          %1317 = dma.vmem_to_hbm [thread:$0]  %s1315, 32, %s1312, %s1296
        $region36: #{tpu_custom_call.1} parent=27 // pred_fallthru
          _
      $region28: #{tpu_custom_call.1} parent=5 // pred_fallthru
        _
      %p1318 = scmp.le.s32.totalorder 2, %s13
      // Predicated region
      $region37: #{tpu_custom_call.1} parent=5 // pred_check
        %p1319 = pneg %p1318
      $region38: #{tpu_custom_call.1} parent=5 // pred_check_branch
        %1321 = sbr.rel (%p1319) target = $region40
      $region39: #{tpu_custom_call.1} parent=5 // pred_region
        %s1322 = ssub.s32 %s13, 2
        // Predicated region
        $region41: #{tpu_custom_call.1} parent=39 // pred_check
          %p1323 = pneg %p110
        $region42: #{tpu_custom_call.1} parent=39 // pred_check_branch
          %1325 = sbr.rel (%p1323) target = $region44
        $region43: #{tpu_custom_call.1} parent=39 // pred_region
          %s1326 = smul.u32 64, %s25
          %p1327 = scmp.lt.s32.totalorder %s24, 3
          %s1328 = scalar_select %p1327, %s24, 3
          %p1329 = scmp.lt.s32.totalorder %s1326, 63
          %s1330 = scalar_select %p1329, %s1326, 63
          %s1331 = smul.addr %s1328, 64
          %s1332 = sadd.s32 %s1330, %s1331
          %s1333 = smul.addr %s1332, 8
          %s1334 = scalar_lea.vmem %s2, %s1333
        $region44: #{tpu_custom_call.1} parent=39 // pred_fallthru
          _
        // Predicated region
        $region45: #{tpu_custom_call.1} parent=39 // pred_check
          %p1335 = pneg %p138
        $region46: #{tpu_custom_call.1} parent=39 // pred_check_branch
          %1337 = sbr.rel (%p1335) target = $region48
        $region47: #{tpu_custom_call.1} parent=39 // pred_region
          %s1338 = sand.u32 %s123, 1
          %s1339 = scalar_lea.sflag [#allocation3], %s1338
          %s1340 = sand.u32 %s123, 1
          %s1341 = smul.addr %s1340, 2
          %s1342 = scalar_lea.vmem [#allocation2], %s1341
          %1343 = dma.done %s1339, 32
        $region48: #{tpu_custom_call.1} parent=39 // pred_fallthru
          _
      $region40: #{tpu_custom_call.1} parent=5 // pred_fallthru
        _
    $region6: #{tpu_custom_call.1} parent=1 // loop_footer
      %s17 = sadd.s32 1, %s13
    $region7: #{tpu_custom_call.1} parent=1 // loop_footer_branch
      %12 = sbr.rel target = $region3
    $region8: #{tpu_custom_call.1} parent=1 // loop_exit
      _
    %1344 = vsyncpa [#allocation3], 1
    %s1345 = scalar_lea.sflag [#allocation3], 1
    %1346 = vsyncpa %s1345, 1

</llo_original>
